<compile_context>
chip_gen: v5e
topology: v5e:2x2
jax: 0.10.0
libtpu: 0.0.40
codegen_flags: <defaults>
</compile_context>

<pallas_src>
import jax
import jax.numpy as jnp
from jax.experimental import pallas as pl
from jax.experimental.pallas import tpu as pltpu  # noqa: F401  (TPU backend extensions)

NEG_SLOPE = 0.2
BN_EPS = 1e-5


def _concat_embed_kernel(inp_ref, embed_ref, w_ref, params_ref, out_ref):
    """Fused Linear(+replication) -> BatchNorm1d(batch stats) -> LeakyReLU -> concat.

    inp_ref   : [B, C*HW]        VMEM  (flattened NCHW input, passed through)
    embed_ref : [B, E]           VMEM
    w_ref     : [E, P*HW]        VMEM  (weight pre-repeated HW times per channel)
    params_ref: [3, P*HW]        VMEM  (rows: bias, gamma, beta; lane-replicated)
    out_ref   : [B, (C+P)*HW]    VMEM  (lane-dense concatenated slab)
    """
    chw = inp_ref.shape[1]

    bias = params_ref[0:1, :]
    gamma = params_ref[1:2, :]
    beta = params_ref[2:3, :]

    # --- Fused Linear + replication: single MXU push ---
    proj = jnp.dot(embed_ref[...], w_ref[...],
                   preferred_element_type=jnp.float32) + bias

    # --- BatchNorm1d, training-mode batch statistics (biased variance).
    #     Per-lane stats == per-channel stats since a channel's HW lanes are
    #     identical across the batch.  Affine fused into the scale. ---
    mean = jnp.mean(proj, axis=0, keepdims=True)
    centered = proj - mean
    var = jnp.mean(centered * centered, axis=0, keepdims=True)
    scale = gamma * jax.lax.rsqrt(var + BN_EPS)      # rsqrt -> EUP slot (free)
    y = centered * scale + beta

    # --- LeakyReLU(0.2): mul + max instead of compare + select ---
    y = jnp.maximum(y, NEG_SLOPE * y)

    # --- Write the concatenated slab directly: [ inp | replicated projection ] ---
    out_ref[:, :chw] = inp_ref[...].astype(out_ref.dtype)
    out_ref[:, chw:] = y.astype(out_ref.dtype)


def prepare_concat_embed_params(w, b, gamma, beta, h=4, w_spatial=4):
    """One-time parameter prep (run at load/update time, NOT per forward).

    w: [E, P]; b/gamma/beta: [P]  ->  (w_rep [E, P*HW], params_rep [3, P*HW])
    """
    hw = h * w_spatial
    w_rep = jnp.repeat(w, hw, axis=1)                                   # [E, P*HW]
    params_rep = jnp.repeat(jnp.stack([b, gamma, beta], axis=0), hw, axis=1)  # [3, P*HW]
    return w_rep, params_rep


def concat_embed(inp, embed, w_rep, params_rep):
    """Pallas port of Concat_embed.forward.

    inp       : [B, C, 4, 4] (NCHW; the module hard-codes a 4x4 replication)
    embed     : [B, E]
    w_rep     : [E, P*HW]   (from prepare_concat_embed_params)
    params_rep: [3, P*HW]
    returns   : [B, C+P, 4, 4]
    """
    B, C, H, W = inp.shape
    HW = H * W
    E = embed.shape[1]
    PHW = w_rep.shape[1]
    P = PHW // HW
    CHW = C * HW

    inp_flat = inp.reshape(B, CHW)        # row-major reshape: free, no data movement

    flops = 2 * B * E * PHW + 10 * B * PHW
    bytes_accessed = 4 * (B * E + E * PHW + 3 * PHW + B * CHW + B * (CHW + PHW))

    slab = pl.pallas_call(
        _concat_embed_kernel,
        out_shape=jax.ShapeDtypeStruct((B, CHW + PHW), inp.dtype),
        cost_estimate=pl.CostEstimate(
            flops=flops, transcendentals=PHW, bytes_accessed=bytes_accessed),
    )(inp_flat, embed, w_rep, params_rep)

    # Row-major [B, (C+P)*HW] -> [B, C+P, H, W] is a pure-metadata reshape.
    return slab.reshape(B, C + P, H, W)


def _reference(inp, embed, w, b, gamma, beta):
    proj = embed @ w + b
    mean = proj.mean(0, keepdims=True)
    var = ((proj - mean) ** 2).mean(0, keepdims=True)
    y = gamma * (proj - mean) / jnp.sqrt(var + BN_EPS) + beta
    y = jnp.where(y >= 0.0, y, NEG_SLOPE * y)
    B, P = y.shape
    rep = jnp.broadcast_to(y[:, :, None, None], (B, P, inp.shape[2], inp.shape[3]))
    return jnp.concatenate([inp, rep], axis=1)


if __name__ == "__main__":
    B, C, H, W = 2, 4, 4, 4         # spatial 4x4 is fixed by repeat(4,4,1,1)
    E, P = 32, 8                    # embed_dim, projected_embed_dim

    key = jax.random.PRNGKey(0)
    k_inp, k_emb, k_w, k_b = jax.random.split(key, 4)

    inp = jax.random.normal(k_inp, (B, C, H, W), dtype=jnp.float32)
    embed = jax.random.normal(k_emb, (B, E), dtype=jnp.float32)

    # Deterministic parameter init (synthetic; not loaded from a checkpoint).
    w = jax.random.normal(k_w, (E, P), dtype=jnp.float32) * (1.0 / jnp.sqrt(E))
    b = jax.random.normal(k_b, (P,), dtype=jnp.float32) * 0.01
    gamma = jnp.ones((P,), dtype=jnp.float32)   # BatchNorm1d weight init
    beta = jnp.zeros((P,), dtype=jnp.float32)   # BatchNorm1d bias init

    # One-time parameter prep (hoisted out of the per-forward path).
    w_rep, params_rep = prepare_concat_embed_params(w, b, gamma, beta, H, W)
    w_rep = jax.block_until_ready(w_rep)
    params_rep = jax.block_until_ready(params_rep)

    out = concat_embed(inp, embed, w_rep, params_rep)
    out = jax.block_until_ready(out)

    ref = _reference(inp, embed, w, b, gamma, beta)
    assert out.shape == (B, C + P, H, W), out.shape
    assert jnp.allclose(out, ref, atol=1e-5, rtol=1e-5), "mismatch vs reference"

    print("KERNEL_OK")
</pallas_src>

<mosaic_0001>
module attributes {stable_mosaic.version = 11 : i64} {
  func.func @_concat_embed_kernel(%arg0: memref<2x64xf32, #tpu.memory_space<vmem>>, %arg1: memref<2x32xf32, #tpu.memory_space<vmem>>, %arg2: memref<32x128xf32, #tpu.memory_space<vmem>>, %arg3: memref<3x128xf32, #tpu.memory_space<vmem>>, %arg4: memref<2x192xf32, #tpu.memory_space<vmem>>) attributes {dimension_semantics = [], scalar_prefetch = 0 : i64, scratch_operands = 0 : i64, tpu.core_type = #tpu.core_type<tc>} {
    %c0 = arith.constant 0 : index
    %c0_0 = arith.constant 0 : index
    %0 = vector.load %arg3[%c0, %c0_0] : memref<3x128xf32, #tpu.memory_space<vmem>>, vector<1x128xf32>
    %c1 = arith.constant 1 : index
    %c0_1 = arith.constant 0 : index
    %1 = vector.load %arg3[%c1, %c0_1] : memref<3x128xf32, #tpu.memory_space<vmem>>, vector<1x128xf32>
    %c2 = arith.constant 2 : index
    %c0_2 = arith.constant 0 : index
    %2 = vector.load %arg3[%c2, %c0_2] : memref<3x128xf32, #tpu.memory_space<vmem>>, vector<1x128xf32>
    %c0_3 = arith.constant 0 : index
    %c0_4 = arith.constant 0 : index
    %3 = vector.load %arg1[%c0_3, %c0_4] : memref<2x32xf32, #tpu.memory_space<vmem>>, vector<2x32xf32>
    %c0_5 = arith.constant 0 : index
    %c0_6 = arith.constant 0 : index
    %4 = vector.load %arg2[%c0_5, %c0_6] : memref<32x128xf32, #tpu.memory_space<vmem>>, vector<32x128xf32>
    %cst = arith.constant dense<0.000000e+00> : vector<2x128xf32>
    %5 = tpu.matmul %3, %4, %cst {dimension_numbers = #tpu.dot_dimension_numbers<[1], [0], [0], [1], [0, 0, 1, 1], [], []>} : vector<2x32xf32>, vector<32x128xf32>, vector<2x128xf32> -> vector<2x128xf32>
    %6 = vector.broadcast %0 : vector<1x128xf32> to vector<2x128xf32>
    %7 = arith.addf %5, %6 : vector<2x128xf32>
    %cst_7 = arith.constant dense<0.000000e+00> : vector<128xf32>
    %8 = vector.multi_reduction <add>, %7, %cst_7 [0] : vector<2x128xf32> to vector<128xf32>
    %9 = vector.shape_cast %8 : vector<128xf32> to vector<1x128xf32>
    %cst_8 = arith.constant 2.000000e+00 : f32
    %10 = vector.broadcast %cst_8 : f32 to vector<1x128xf32>
    %11 = arith.divf %9, %10 : vector<1x128xf32>
    %12 = vector.broadcast %11 : vector<1x128xf32> to vector<2x128xf32>
    %13 = arith.subf %7, %12 : vector<2x128xf32>
    %14 = arith.mulf %13, %13 : vector<2x128xf32>
    %cst_9 = arith.constant dense<0.000000e+00> : vector<128xf32>
    %15 = vector.multi_reduction <add>, %14, %cst_9 [0] : vector<2x128xf32> to vector<128xf32>
    %16 = vector.shape_cast %15 : vector<128xf32> to vector<1x128xf32>
    %cst_10 = arith.constant 2.000000e+00 : f32
    %17 = vector.broadcast %cst_10 : f32 to vector<1x128xf32>
    %18 = arith.divf %16, %17 : vector<1x128xf32>
    %cst_11 = arith.constant 9.99999974E-6 : f32
    %19 = vector.broadcast %cst_11 : f32 to vector<1x128xf32>
    %20 = arith.addf %18, %19 : vector<1x128xf32>
    %21 = math.rsqrt %20 : vector<1x128xf32>
    %22 = arith.mulf %1, %21 : vector<1x128xf32>
    %23 = vector.broadcast %22 : vector<1x128xf32> to vector<2x128xf32>
    %24 = arith.mulf %13, %23 : vector<2x128xf32>
    %25 = vector.broadcast %2 : vector<1x128xf32> to vector<2x128xf32>
    %26 = arith.addf %24, %25 : vector<2x128xf32>
    %cst_12 = arith.constant 2.000000e-01 : f32
    %27 = vector.broadcast %cst_12 : f32 to vector<2x128xf32>
    %28 = arith.mulf %27, %26 : vector<2x128xf32>
    %29 = arith.maximumf %26, %28 : vector<2x128xf32>
    %c0_13 = arith.constant 0 : index
    %c0_14 = arith.constant 0 : index
    %30 = vector.load %arg0[%c0_13, %c0_14] : memref<2x64xf32, #tpu.memory_space<vmem>>, vector<2x64xf32>
    %c0_15 = arith.constant 0 : index
    %c0_16 = arith.constant 0 : index
    %31 = vector.load %arg4[%c0_15, %c0_16] : memref<2x192xf32, #tpu.memory_space<vmem>>, vector<2x64xf32>
    tpu.vector_store %arg4[%c0_15, %c0_16], %30 {strides = array<i32>} : memref<2x192xf32, #tpu.memory_space<vmem>>, vector<2x64xf32>,
    %c0_17 = arith.constant 0 : index
    %c64 = arith.constant 64 : index
    %32 = vector.load %arg4[%c0_17, %c64] : memref<2x192xf32, #tpu.memory_space<vmem>>, vector<2x128xf32>
    tpu.vector_store %arg4[%c0_17, %c64], %29 {strides = array<i32>} : memref<2x192xf32, #tpu.memory_space<vmem>>, vector<2x128xf32>,
    return
  }
}

</mosaic_0001>

<llo_original>
// kernel: tpu_custom_call.1
$region0: #{tpu_custom_call.1}
  #allocation0 [shape = 'u32[]', space=smem, size = 0x4, offset = 0x4, fixed_abs, tag = 'smem constant byte address 0x4 - core index']
  #allocation1 [shape = 'u32[72,128]{1,0:T(1,128)}', space=vmem, size = 0x9000, scoped, tag = 'internal scratch']
  %s0 = inlined_call_operand.hbm [shape: f32[2,64], index: 0, kind: input, shape index: {}]
  %s1 = inlined_call_operand.hbm [shape: f32[2,32], index: 1, kind: input, shape index: {}]
  %s2 = inlined_call_operand.hbm [shape: f32[32,128], index: 2, kind: input, shape index: {}]
  %s3 = inlined_call_operand.hbm [shape: f32[3,128], index: 3, kind: input, shape index: {}]
  %s4 = inlined_call_operand.hbm [shape: f32[2,192], index: 4, kind: output, shape index: {}]
  %s5 = sld [smem:[#allocation0]]
  $region42: #{tpu_custom_call.1} parent=0
    _
  %s7 = ssub.s32 1, %s5
  %s8 = scalar_select 0, %s7, %s5
  $region1: #{tpu_custom_call.1} parent=0
    #allocation2 [shape = 'u8[1024]{0}', space=vmem, size = 0x400, scoped, tag = 'input window, operand 0, single buffered']
    #allocation3 [shape = 's32[1]{0}', space=sflag, size = 0x4, scoped, tag = 'scoped memory for tpu_custom_call.1']
    #allocation4 [shape = 's32[1]{0}', space=sflag, size = 0x4, scoped, tag = 'scoped memory for tpu_custom_call.1']
    #allocation5 [shape = 'u8[1024]{0}', space=vmem, size = 0x400, scoped, tag = 'input window, operand 1, single buffered']
    #allocation6 [shape = 's32[1]{0}', space=sflag, size = 0x4, scoped, tag = 'scoped memory for tpu_custom_call.1']
    #allocation7 [shape = 'u8[16384]{0}', space=vmem, size = 0x4000, scoped, tag = 'input window, operand 2, single buffered']
    #allocation8 [shape = 'u8[2048]{0}', space=vmem, size = 0x800, scoped, tag = 'input window, operand 3, single buffered']
    #allocation9 [shape = 's32[1]{0}', space=sflag, size = 0x4, scoped, tag = 'scoped memory for tpu_custom_call.1']
    #allocation10 [shape = 'u8[2048]{0}', space=vmem, size = 0x800, scoped, tag = 'output window, operand 0, single buffered']
    %9 = vsyncpa [#allocation3], 0
    %10 = vsyncpa [#allocation6], 0
    %11 = vsyncpa [#allocation9], 0
    %12 = vsyncpa [#allocation4], 0
    // Predicated region
    $region2: #{tpu_custom_call.1} parent=1 // pred_check
      _
    $region3: #{tpu_custom_call.1} parent=1 // pred_check_branch
      %14 = sbr.rel (0) target = $region5
    $region4: #{tpu_custom_call.1} parent=1 // pred_region
      %16 = vsyncadd [#allocation3], 0
      %s18 = sshll.u32 %s0, 4
      %s19 = int_to_ptr.hbm [resolvable:$true] %s18
      %s20 = sshll.u32 [#allocation2], 4
      %s21 = int_to_ptr.vmem [resolvable:$true] %s20
      %23 = dma.hbm_to_vmem [thread:$0]  %s19, 32, %s21, [#allocation3]
    $region5: #{tpu_custom_call.1} parent=1 // pred_fallthru
      _
    // Predicated region
    $region6: #{tpu_custom_call.1} parent=1 // pred_check
      _
    $region7: #{tpu_custom_call.1} parent=1 // pred_check_branch
      %25 = sbr.rel (0) target = $region9
    $region8: #{tpu_custom_call.1} parent=1 // pred_region
      %27 = vsyncadd [#allocation6], 0
      %s29 = sshll.u32 %s1, 4
      %s30 = int_to_ptr.hbm [resolvable:$true] %s29
      %s31 = sshll.u32 [#allocation5], 4
      %s32 = int_to_ptr.vmem [resolvable:$true] %s31
      %34 = dma.hbm_to_vmem [thread:$0]  %s30, 32, %s32, [#allocation6]
    $region9: #{tpu_custom_call.1} parent=1 // pred_fallthru
      _
    // Predicated region
    $region10: #{tpu_custom_call.1} parent=1 // pred_check
      _
    $region11: #{tpu_custom_call.1} parent=1 // pred_check_branch
      %36 = sbr.rel (0) target = $region13
    $region12: #{tpu_custom_call.1} parent=1 // pred_region
      %38 = vsyncadd [#allocation6], 0
      %s39 = sshll.u32 %s2, 4
      %s40 = int_to_ptr.hbm [resolvable:$true] %s39
      %s41 = sshll.u32 [#allocation7], 4
      %s42 = int_to_ptr.vmem [resolvable:$true] %s41
      %47 = dma.hbm_to_vmem [thread:$0]  %s40, 512, %s42, [#allocation6], 128, 128, 8
    $region13: #{tpu_custom_call.1} parent=1 // pred_fallthru
      _
    // Predicated region
    $region14: #{tpu_custom_call.1} parent=1 // pred_check
      _
    $region15: #{tpu_custom_call.1} parent=1 // pred_check_branch
      %49 = sbr.rel (0) target = $region17
    $region16: #{tpu_custom_call.1} parent=1 // pred_region
      %51 = vsyncadd [#allocation9], 0
      %s53 = sshll.u32 %s3, 4
      %s54 = int_to_ptr.hbm [resolvable:$true] %s53
      %s55 = sshll.u32 [#allocation8], 4
      %s56 = int_to_ptr.vmem [resolvable:$true] %s55
      %58 = dma.hbm_to_vmem [thread:$0]  %s54, 64, %s56, [#allocation9]
    $region17: #{tpu_custom_call.1} parent=1 // pred_fallthru
      _
    // Predicated region
    $region18: #{tpu_custom_call.1} parent=1 // pred_check
      _
    $region19: #{tpu_custom_call.1} parent=1 // pred_check_branch
      %60 = sbr.rel (0) target = $region21
    $region20: #{tpu_custom_call.1} parent=1 // pred_region
      %62 = dma.done [#allocation3], 32
    $region21: #{tpu_custom_call.1} parent=1 // pred_fallthru
      _
    // Predicated region
    $region22: #{tpu_custom_call.1} parent=1 // pred_check
      _
    $region23: #{tpu_custom_call.1} parent=1 // pred_check_branch
      %64 = sbr.rel (0) target = $region25
    $region24: #{tpu_custom_call.1} parent=1 // pred_region
      %66 = dma.done [#allocation6], 32
    $region25: #{tpu_custom_call.1} parent=1 // pred_fallthru
      _
    // Predicated region
    $region26: #{tpu_custom_call.1} parent=1 // pred_check
      _
    $region27: #{tpu_custom_call.1} parent=1 // pred_check_branch
      %68 = sbr.rel (0) target = $region29
    $region28: #{tpu_custom_call.1} parent=1 // pred_region
      %70 = dma.done [#allocation6], 512
    $region29: #{tpu_custom_call.1} parent=1 // pred_fallthru
      _
    // Predicated region
    $region30: #{tpu_custom_call.1} parent=1 // pred_check
      _
    $region31: #{tpu_custom_call.1} parent=1 // pred_check_branch
      %72 = sbr.rel (0) target = $region33
    $region32: #{tpu_custom_call.1} parent=1 // pred_region
      %74 = dma.done [#allocation9], 64
    $region33: #{tpu_custom_call.1} parent=1 // pred_fallthru
      _
    %v75 = vld [vmem:[#allocation8] sm:$0x1]
    %v76 = vld [vmem:[#allocation8 + $0x1] sm:$0x1]
    %v77 = vld [vmem:[#allocation8 + $0x2] sm:$0x1]
    %v78 = vld [vmem:[#allocation5] sm:$0x3]
    %v79 = vld [vmem:[#allocation7] sm:$0xff]
    %v80 = vld [vmem:[#allocation7 + $0x8] sm:$0xff]
    %v81 = vld [vmem:[#allocation7 + $0x10] sm:$0xff]
    %v82 = vld [vmem:[#allocation7 + $0x18] sm:$0xff]
    %v83 = vperm.slane %v75, 0
    %vm84 = vcmask 261120
    %v86 = vsel %vm84, %v78, 0
    %88 = vmatpush.msra.mxu0 0.0
    %89 = vmatpush.msra.mxu0 0.0
    %90 = vmatpush.msra.mxu0 0.0
    %91 = vmatpush.msra.mxu0 0.0
    %92 = vmatpush.msra.mxu0 0.0
    %93 = vmatpush.msra.mxu0 0.0
    %94 = vmatpush.msra.mxu0 0.0
    %95 = vmatpush.msra.mxu0 0.0
    %96 = vmatpush.msra.mxu0 0.0
    %97 = vmatpush.msra.mxu0 0.0
    %98 = vmatpush.msra.mxu0 0.0
    %99 = vmatpush.msra.mxu0 0.0
    %100 = vmatpush.msra.mxu0 %v82
    %101 = vmatpush.msra.mxu0 %v81
    %102 = vmatpush.msra.mxu0 %v80
    %103 = vmatpush.msra.mxu0 %v79
    %104 = vmatmul.f32.gmra.mxu0 %v86
    %v105 = vpop.f32.mrf.mxu0
    %v106 = vadd.f32 %v83, %v105
    %107 = vdwg.mxu0
    %vm108 = vcmask 1041408
    %v109 = vsel %vm108, %v106, 0.0
    %v110 = vrot.slane %v109, 4
    %v111 = vadd.f32 %v109, %v110
    %v112 = vrot.slane %v111, 2
    %v113 = vadd.f32 %v111, %v112
    %v114 = vrot.slane %v113, 1
    %v115 = vadd.f32 %v113, %v114
    %v116 = vrcp.pop 2.0
    %v117 = vmul.f32 2.0, %v116
    %v118 = vsub.f32 1.0, %v117
    %v119 = vmul.f32 %v116, %v118
    %v120 = vadd.f32 %v116, %v119
    %vm121 = vweird.f32 %v116
    %v122 = vsel %vm121, %v116, %v120
    %v123 = vmul.f32 %v115, %v122
    %v124 = vsub.f32 %v106, %v123
    %v125 = vmul.f32 %v124, %v124
    %v126 = vsel %vm108, %v125, 0.0
    %v127 = vrot.slane %v126, 4
    %v128 = vadd.f32 %v126, %v127
    %v129 = vrot.slane %v128, 2
    %v130 = vadd.f32 %v128, %v129
    %v131 = vrot.slane %v130, 1
    %v132 = vadd.f32 %v130, %v131
    %v133 = vmul.f32 %v132, %v122
    %v134 = vadd.f32 %v133, 1e-05
    %v135 = vrsqrt.pop %v134
    %v136 = vmul.f32 %v135, %v134
    %v137 = vmul.f32 %v136, %v135
    %v138 = vmul.f32 0.5, %v137
    %v139 = vsub.f32 1.5, %v138
    %v140 = vmul.f32 %v135, %v139
    %vm141 = vweird.f32 %v134
    %vm142 = vweird.f32 %v135
    %vm143 = vmor %vm141, %vm142
    %v144 = vsel %vm143, %v135, %v140
    %v145 = vmul.f32 %v76, %v144
    %v146 = vperm.slane %v145, 0
    %v147 = vmul.f32 %v124, %v146
    %v148 = vperm.slane %v77, 0
    %v149 = vadd.f32 %v147, %v148
    %v150 = vmul.f32 %v149, 0.2
    %v151 = vmax.f32 %v149, %v150
    %v152 = vld [vmem:[#allocation2] sm:$0x3]
    %vm153 = vcmask 517120
    %154 = vst.msk [vmem:[#allocation10] sm:$0x3] %vm153, %v152
    %156 = vrot.lane.b32.xlu0 %v151, 64
    %v157 = vpop.permute.xlu0 %156
    %v158 = vrot.slane %v157, 6
    %vm159 = vcmask 523264
    %v160 = vsel %vm159, %v158, %v157
    %vm162 = vcmask 1041920
    %vm163 = vcmask 519170
    %vm164 = vmor %vm163, %vm162
    %165 = vst.msk [vmem:[#allocation10] sm:$0xf] %vm164, %v160
    // Predicated region
    $region34: #{tpu_custom_call.1} parent=1 // pred_check
      _
    $region35: #{tpu_custom_call.1} parent=1 // pred_check_branch
      %167 = sbr.rel (0) target = $region37
    $region36: #{tpu_custom_call.1} parent=1 // pred_region
      %169 = vsyncadd [#allocation4], 0
      %s171 = sshll.u32 [#allocation10], 4
      %s172 = int_to_ptr.vmem [resolvable:$true] %s171
      %s173 = sshll.u32 %s4, 4
      %s174 = int_to_ptr.hbm [resolvable:$true] %s173
      %176 = dma.vmem_to_hbm [thread:$0]  %s172, 64, %s174, [#allocation4]
    $region37: #{tpu_custom_call.1} parent=1 // pred_fallthru
      _
    // Predicated region
    $region38: #{tpu_custom_call.1} parent=1 // pred_check
      _
    $region39: #{tpu_custom_call.1} parent=1 // pred_check_branch
      %178 = sbr.rel (0) target = $region41
    $region40: #{tpu_custom_call.1} parent=1 // pred_region
      %180 = dma.done [#allocation4], 64
    $region41: #{tpu_custom_call.1} parent=1 // pred_fallthru
      _
    %181 = vsyncpa [#allocation3], 1
    %182 = vsyncpa [#allocation6], 1
    %183 = vsyncpa [#allocation9], 1
    %184 = vsyncpa [#allocation4], 1

</llo_original>
